<compile_context>
chip_gen: v7x
topology: tpu7x:2x2x1
jax: 0.10.0
libtpu: 0.0.40
codegen_flags: <defaults>
</compile_context>

<pallas_src>
import jax
import jax.numpy as jnp
from jax.experimental import pallas as pl
from jax.experimental.pallas import tpu as pltpu

HIDDEN = 128  # all hidden activations are zero-padded to 128 features


def mlp_kernel(x_ref, w1_ref, b1_ref, w2_ref, b2_ref,
               w3_ref, b3_ref, w4_ref, b4_ref, o_ref):
    x = x_ref[...]                                        # (1, tile_n)

    # fc1 (fan_in=1): a K=1 matmul is pure MXU overhead -> broadcast FMA (VPU).
    h = jnp.maximum(w1_ref[...] * x + b1_ref[...], 0.0)   # (128, tile_n)

    # fc2 / fc3: dense 128x128 matmuls on the MXU.  Padded feature rows stay
    # exactly 0 because the padded weight rows / biases are 0 and relu(0) = 0.
    h = jnp.maximum(
        jnp.dot(w2_ref[...], h, preferred_element_type=jnp.float32)
        + b2_ref[...], 0.0)                                # (128, tile_n)
    h = jnp.maximum(
        jnp.dot(w3_ref[...], h, preferred_element_type=jnp.float32)
        + b3_ref[...], 0.0)                                # (128, tile_n)

    # fc4 (fan_out=1): N=1 matmul -> VPU multiply + sublane reduction (XLU).
    o_ref[...] = jnp.sum(w4_ref[...] * h, axis=0, keepdims=True) + b4_ref[...]


def mlp_forward(x, packed, *, tile_n=512):
    """x: (N, 1) f32 (PyTorch layout). packed: padded params from pack_params.

    tile_n is the batch tile on the lane axis; keep it a multiple of 256
    (fills the v6e/v7x 256-wide MXU, and is 2x the v5e 128-wide MXU).
    """
    N = x.shape[0]
    x_row = x.reshape(1, N)
    n_tiles = pl.cdiv(N, tile_n)
    padded_n = n_tiles * tile_n
    if padded_n != N:
        x_row = jnp.pad(x_row, ((0, 0), (0, padded_n - N)))

    def weight_spec():
        # Constant small parameters: one VMEM-resident copy, no per-step
        # pipelining / double buffering.
        return pl.BlockSpec(memory_space=pltpu.MemorySpace.VMEM)

    out_row = pl.pallas_call(
        mlp_kernel,
        out_shape=jax.ShapeDtypeStruct((1, padded_n), jnp.float32),
        grid_spec=pltpu.PrefetchScalarGridSpec(
            num_scalar_prefetch=0,
            grid=(n_tiles,),
            in_specs=[
                pl.BlockSpec((1, tile_n), lambda i: (0, i)),   # x (lane-dense)
                weight_spec(), weight_spec(),                  # w1, b1
                weight_spec(), weight_spec(),                  # w2, b2
                weight_spec(), weight_spec(),                  # w3, b3
                weight_spec(), weight_spec(),                  # w4, b4
            ],
            out_specs=pl.BlockSpec((1, tile_n), lambda i: (0, i)),
        ),
        compiler_params=pltpu.CompilerParams(
            dimension_semantics=("parallel",)),
    )(x_row, packed["w1"], packed["b1"], packed["w2"], packed["b2"],
      packed["w3"], packed["b3"], packed["w4"], packed["b4"])

    return out_row[:, :N].reshape(N, 1)


def init_params(key):
    """PyTorch-layout params: w_i is (out, in), b_i is (out,), init mirrors
    nn.Linear's uniform(-1/sqrt(fan_in), +1/sqrt(fan_in))."""
    dims = [1, 128, 64, 32, 1]
    raw = {}
    for idx in range(4):
        fan_in, fan_out = dims[idx], dims[idx + 1]
        key, kw, kb = jax.random.split(key, 3)
        bound = 1.0 / (fan_in ** 0.5)
        raw[f"w{idx + 1}"] = jax.random.uniform(
            kw, (fan_out, fan_in), jnp.float32, -bound, bound)
        raw[f"b{idx + 1}"] = jax.random.uniform(
            kb, (fan_out,), jnp.float32, -bound, bound)
    return raw


def pack_params(raw):
    """Kernel layout: feature-major (out, in), hidden widths zero-padded to 128.
    Padding is numerically transparent: padded weight rows / biases are 0, so
    padded activations are relu(0)=0 and padded w4 rows contribute nothing."""
    H = HIDDEN
    w2 = jnp.zeros((H, H), jnp.float32).at[:64, :128].set(raw["w2"])
    b2 = jnp.zeros((H, 1), jnp.float32).at[:64, 0].set(raw["b2"])
    w3 = jnp.zeros((H, H), jnp.float32).at[:32, :64].set(raw["w3"])
    b3 = jnp.zeros((H, 1), jnp.float32).at[:32, 0].set(raw["b3"])
    w4 = jnp.zeros((H, 1), jnp.float32).at[:32, 0].set(raw["w4"][0])
    return {
        "w1": raw["w1"].reshape(H, 1),
        "b1": raw["b1"].reshape(H, 1),
        "w2": w2, "b2": b2,
        "w3": w3, "b3": b3,
        "w4": w4,
        "b4": raw["b4"].reshape(1, 1),
    }


def reference_forward(x, raw):
    h = jnp.maximum(x @ raw["w1"].T + raw["b1"], 0.0)
    h = jnp.maximum(h @ raw["w2"].T + raw["b2"], 0.0)
    h = jnp.maximum(h @ raw["w3"].T + raw["b3"], 0.0)
    return h @ raw["w4"].T + raw["b4"]


if __name__ == "__main__":
    key = jax.random.PRNGKey(0)
    key, kx = jax.random.split(key)
    N = 64                                            # batch of scalar samples
    x = jax.random.normal(kx, (N, 1), jnp.float32)    # mirrors x.reshape(-1, 1)
    raw = init_params(key)
    packed = pack_params(raw)

    # Tiny demo batch: one 256-wide lane tile.  For large N keep the default
    # tile_n=512 (or larger) so the grid amortizes per-step overhead.
    out = mlp_forward(x, packed, tile_n=256)
    out = jax.block_until_ready(out)

    ref = reference_forward(x, raw)
    assert out.shape == (N, 1)
    assert jnp.allclose(out, ref, atol=1e-5, rtol=1e-5)
    print("KERNEL_OK")
</pallas_src>

<mosaic_0001>
module attributes {stable_mosaic.version = 11 : i64} {
  func.func @mlp_kernel(%arg0: i32, %arg1: memref<1x256xf32, #tpu.memory_space<vmem>>, %arg2: memref<128x1xf32, #tpu.memory_space<vmem>>, %arg3: memref<128x1xf32, #tpu.memory_space<vmem>>, %arg4: memref<128x128xf32, #tpu.memory_space<vmem>>, %arg5: memref<128x1xf32, #tpu.memory_space<vmem>>, %arg6: memref<128x128xf32, #tpu.memory_space<vmem>>, %arg7: memref<128x1xf32, #tpu.memory_space<vmem>>, %arg8: memref<128x1xf32, #tpu.memory_space<vmem>>, %arg9: memref<1x1xf32, #tpu.memory_space<vmem>>, %arg10: memref<1x256xf32, #tpu.memory_space<vmem>>) attributes {dimension_semantics = [#tpu.dimension_semantics<parallel>], iteration_bounds = array<i64: 1>, scalar_prefetch = 0 : i64, scratch_operands = 0 : i64, tpu.core_type = #tpu.core_type<tc>, window_params = [{transform_indices = @transform_0, window_bounds = array<i64: 1, 256>}, {pipeline_mode = #tpu.pipeline_mode<synchronous>, transform_indices = @transform_1, window_bounds = array<i64: 128, 1>}, {pipeline_mode = #tpu.pipeline_mode<synchronous>, transform_indices = @transform_2, window_bounds = array<i64: 128, 1>}, {pipeline_mode = #tpu.pipeline_mode<synchronous>, transform_indices = @transform_3, window_bounds = array<i64: 128, 128>}, {pipeline_mode = #tpu.pipeline_mode<synchronous>, transform_indices = @transform_4, window_bounds = array<i64: 128, 1>}, {pipeline_mode = #tpu.pipeline_mode<synchronous>, transform_indices = @transform_5, window_bounds = array<i64: 128, 128>}, {pipeline_mode = #tpu.pipeline_mode<synchronous>, transform_indices = @transform_6, window_bounds = array<i64: 128, 1>}, {pipeline_mode = #tpu.pipeline_mode<synchronous>, transform_indices = @transform_7, window_bounds = array<i64: 128, 1>}, {pipeline_mode = #tpu.pipeline_mode<synchronous>, transform_indices = @transform_8, window_bounds = array<i64: 1, 1>}, {transform_indices = @transform_9, window_bounds = array<i64: 1, 256>}]} {
    %c0 = arith.constant 0 : index
    %c0_0 = arith.constant 0 : index
    %0 = vector.load %arg1[%c0, %c0_0] : memref<1x256xf32, #tpu.memory_space<vmem>>, vector<1x256xf32>
    %c0_1 = arith.constant 0 : index
    %c0_2 = arith.constant 0 : index
    %1 = vector.load %arg2[%c0_1, %c0_2] : memref<128x1xf32, #tpu.memory_space<vmem>>, vector<128x1xf32>
    %2 = vector.broadcast %1 : vector<128x1xf32> to vector<128x256xf32>
    %3 = vector.broadcast %0 : vector<1x256xf32> to vector<128x256xf32>
    %4 = arith.mulf %2, %3 : vector<128x256xf32>
    %c0_3 = arith.constant 0 : index
    %c0_4 = arith.constant 0 : index
    %5 = vector.load %arg3[%c0_3, %c0_4] : memref<128x1xf32, #tpu.memory_space<vmem>>, vector<128x1xf32>
    %6 = vector.broadcast %5 : vector<128x1xf32> to vector<128x256xf32>
    %7 = arith.addf %4, %6 : vector<128x256xf32>
    %cst = arith.constant 0.000000e+00 : f32
    %8 = vector.broadcast %cst : f32 to vector<128x256xf32>
    %9 = arith.maximumf %7, %8 : vector<128x256xf32>
    %c0_5 = arith.constant 0 : index
    %c0_6 = arith.constant 0 : index
    %10 = vector.load %arg4[%c0_5, %c0_6] : memref<128x128xf32, #tpu.memory_space<vmem>>, vector<128x128xf32>
    %cst_7 = arith.constant dense<0.000000e+00> : vector<128x256xf32>
    %11 = tpu.matmul %10, %9, %cst_7 {dimension_numbers = #tpu.dot_dimension_numbers<[1], [0], [0], [1], [0, 0, 1, 1], [], []>} : vector<128x128xf32>, vector<128x256xf32>, vector<128x256xf32> -> vector<128x256xf32>
    %c0_8 = arith.constant 0 : index
    %c0_9 = arith.constant 0 : index
    %12 = vector.load %arg5[%c0_8, %c0_9] : memref<128x1xf32, #tpu.memory_space<vmem>>, vector<128x1xf32>
    %13 = vector.broadcast %12 : vector<128x1xf32> to vector<128x256xf32>
    %14 = arith.addf %11, %13 : vector<128x256xf32>
    %cst_10 = arith.constant 0.000000e+00 : f32
    %15 = vector.broadcast %cst_10 : f32 to vector<128x256xf32>
    %16 = arith.maximumf %14, %15 : vector<128x256xf32>
    %c0_11 = arith.constant 0 : index
    %c0_12 = arith.constant 0 : index
    %17 = vector.load %arg6[%c0_11, %c0_12] : memref<128x128xf32, #tpu.memory_space<vmem>>, vector<128x128xf32>
    %cst_13 = arith.constant dense<0.000000e+00> : vector<128x256xf32>
    %18 = tpu.matmul %17, %16, %cst_13 {dimension_numbers = #tpu.dot_dimension_numbers<[1], [0], [0], [1], [0, 0, 1, 1], [], []>} : vector<128x128xf32>, vector<128x256xf32>, vector<128x256xf32> -> vector<128x256xf32>
    %c0_14 = arith.constant 0 : index
    %c0_15 = arith.constant 0 : index
    %19 = vector.load %arg7[%c0_14, %c0_15] : memref<128x1xf32, #tpu.memory_space<vmem>>, vector<128x1xf32>
    %20 = vector.broadcast %19 : vector<128x1xf32> to vector<128x256xf32>
    %21 = arith.addf %18, %20 : vector<128x256xf32>
    %cst_16 = arith.constant 0.000000e+00 : f32
    %22 = vector.broadcast %cst_16 : f32 to vector<128x256xf32>
    %23 = arith.maximumf %21, %22 : vector<128x256xf32>
    %c0_17 = arith.constant 0 : index
    %c0_18 = arith.constant 0 : index
    %24 = vector.load %arg8[%c0_17, %c0_18] : memref<128x1xf32, #tpu.memory_space<vmem>>, vector<128x1xf32>
    %25 = vector.broadcast %24 : vector<128x1xf32> to vector<128x256xf32>
    %26 = arith.mulf %25, %23 : vector<128x256xf32>
    %cst_19 = arith.constant dense<0.000000e+00> : vector<256xf32>
    %27 = vector.multi_reduction <add>, %26, %cst_19 [0] : vector<128x256xf32> to vector<256xf32>
    %28 = vector.shape_cast %27 : vector<256xf32> to vector<1x256xf32>
    %c0_20 = arith.constant 0 : index
    %c0_21 = arith.constant 0 : index
    %29 = vector.load %arg9[%c0_20, %c0_21] : memref<1x1xf32, #tpu.memory_space<vmem>>, vector<1x1xf32>
    %30 = vector.broadcast %29 : vector<1x1xf32> to vector<1x256xf32>
    %31 = arith.addf %28, %30 : vector<1x256xf32>
    %c0_22 = arith.constant 0 : index
    %c0_23 = arith.constant 0 : index
    %32 = vector.load %arg10[%c0_22, %c0_23] : memref<1x256xf32, #tpu.memory_space<vmem>>, vector<1x256xf32>
    tpu.vector_store %arg10[%c0_22, %c0_23], %31 {strides = array<i32>} : memref<1x256xf32, #tpu.memory_space<vmem>>, vector<1x256xf32>,
    return
  }
  func.func @transform_0(%arg0: i32) -> (i32, i32) {
    %c0_i32 = arith.constant 0 : i32
    %c0_i32_0 = arith.constant 0 : i32
    return %c0_i32, %arg0 : i32, i32
  }
  func.func @transform_1(%arg0: i32) -> (i32, i32) {
    %c0_i32 = arith.constant 0 : i32
    %c0_i32_0 = arith.constant 0 : i32
    %c0_i32_1 = arith.constant 0 : i32
    return %c0_i32, %c0_i32_0 : i32, i32
  }
  func.func @transform_2(%arg0: i32) -> (i32, i32) {
    %c0_i32 = arith.constant 0 : i32
    %c0_i32_0 = arith.constant 0 : i32
    %c0_i32_1 = arith.constant 0 : i32
    return %c0_i32, %c0_i32_0 : i32, i32
  }
  func.func @transform_3(%arg0: i32) -> (i32, i32) {
    %c0_i32 = arith.constant 0 : i32
    %c0_i32_0 = arith.constant 0 : i32
    %c0_i32_1 = arith.constant 0 : i32
    return %c0_i32, %c0_i32_0 : i32, i32
  }
  func.func @transform_4(%arg0: i32) -> (i32, i32) {
    %c0_i32 = arith.constant 0 : i32
    %c0_i32_0 = arith.constant 0 : i32
    %c0_i32_1 = arith.constant 0 : i32
    return %c0_i32, %c0_i32_0 : i32, i32
  }
  func.func @transform_5(%arg0: i32) -> (i32, i32) {
    %c0_i32 = arith.constant 0 : i32
    %c0_i32_0 = arith.constant 0 : i32
    %c0_i32_1 = arith.constant 0 : i32
    return %c0_i32, %c0_i32_0 : i32, i32
  }
  func.func @transform_6(%arg0: i32) -> (i32, i32) {
    %c0_i32 = arith.constant 0 : i32
    %c0_i32_0 = arith.constant 0 : i32
    %c0_i32_1 = arith.constant 0 : i32
    return %c0_i32, %c0_i32_0 : i32, i32
  }
  func.func @transform_7(%arg0: i32) -> (i32, i32) {
    %c0_i32 = arith.constant 0 : i32
    %c0_i32_0 = arith.constant 0 : i32
    %c0_i32_1 = arith.constant 0 : i32
    return %c0_i32, %c0_i32_0 : i32, i32
  }
  func.func @transform_8(%arg0: i32) -> (i32, i32) {
    %c0_i32 = arith.constant 0 : i32
    %c0_i32_0 = arith.constant 0 : i32
    %c0_i32_1 = arith.constant 0 : i32
    return %c0_i32, %c0_i32_0 : i32, i32
  }
  func.func @transform_9(%arg0: i32) -> (i32, i32) {
    %c0_i32 = arith.constant 0 : i32
    %c0_i32_0 = arith.constant 0 : i32
    return %c0_i32, %arg0 : i32, i32
  }
}

</mosaic_0001>

<llo_original>
// kernel: tpu_custom_call.1
$region0: #{tpu_custom_call.1}
  #allocation0 [shape = 'u32[]', space=smem, size = 0x4, offset = 0x4, fixed_abs, tag = 'smem constant byte address 0x4 - core index']
  #allocation1 [shape = 'u32[144,128]{1,0:T(1,128)}', space=vmem, size = 0x12000, scoped, tag = 'internal scratch']
  #allocation2 [shape = 'f32[1,1]{1,0:T(1,128)S(1)}', space=vmem, size = 0x200, scoped, tag = 'scoped memory for tpu_custom_call.1']
  %s0 = inlined_call_operand.vmem [shape: f32[1,256], index: 0, kind: input, shape index: {}]
  %s1 = inlined_call_operand.vmem [shape: f32[128,1], index: 1, kind: input, shape index: {}]
  %s2 = inlined_call_operand.vmem [shape: f32[128,1], index: 2, kind: input, shape index: {}]
  %s3 = inlined_call_operand.vmem [shape: f32[128,128], index: 3, kind: input, shape index: {}]
  %s4 = inlined_call_operand.vmem [shape: f32[128,1], index: 4, kind: input, shape index: {}]
  %s5 = inlined_call_operand.vmem [shape: f32[128,128], index: 5, kind: input, shape index: {}]
  %s6 = inlined_call_operand.vmem [shape: f32[128,1], index: 6, kind: input, shape index: {}]
  %s7 = inlined_call_operand.vmem [shape: f32[128,1], index: 7, kind: input, shape index: {}]
  %s8 = inlined_call_operand.<no memory space> [shape: f32[1,1], index: 8, kind: input, shape index: {}]
  %s9 = inlined_call_operand.hbm [shape: f32[1,256], index: 9, kind: output, shape index: {}]
  %s10 = sld [smem:[#allocation0]]
  $region46: #{tpu_custom_call.1} parent=0
    _
  %s12 = ssub.s32 1, %s10
  %s13 = scalar_select 0, %s12, %s10
  %v14 = vstv %s8
  %15 = vst [vmem:[#allocation2] sm:$0x1] %v14
  $region1: #{tpu_custom_call.1} parent=0
    #allocation3 [shape = 'u8[1024]{0}', space=vmem, size = 0x400, scoped, tag = 'output window, operand 0, single buffered']
    #allocation4 [shape = 's32[1]{0}', space=sflag, size = 0x4, scoped, tag = 'scoped memory for tpu_custom_call.1']
    %16 = vsyncpa [#allocation4], 0
    // Predicated region
    $region2: #{tpu_custom_call.1} parent=1 // pred_check
      _
    $region3: #{tpu_custom_call.1} parent=1 // pred_check_branch
      %18 = sbr.rel (0) target = $region5
    $region4: #{tpu_custom_call.1} parent=1 // pred_region
      _
    $region5: #{tpu_custom_call.1} parent=1 // pred_fallthru
      _
    // Predicated region
    $region6: #{tpu_custom_call.1} parent=1 // pred_check
      _
    $region7: #{tpu_custom_call.1} parent=1 // pred_check_branch
      %20 = sbr.rel (0) target = $region9
    $region8: #{tpu_custom_call.1} parent=1 // pred_region
      _
    $region9: #{tpu_custom_call.1} parent=1 // pred_fallthru
      _
    // Predicated region
    $region10: #{tpu_custom_call.1} parent=1 // pred_check
      _
    $region11: #{tpu_custom_call.1} parent=1 // pred_check_branch
      %22 = sbr.rel (0) target = $region13
    $region12: #{tpu_custom_call.1} parent=1 // pred_region
      _
    $region13: #{tpu_custom_call.1} parent=1 // pred_fallthru
      _
    // Predicated region
    $region14: #{tpu_custom_call.1} parent=1 // pred_check
      _
    $region15: #{tpu_custom_call.1} parent=1 // pred_check_branch
      %24 = sbr.rel (0) target = $region17
    $region16: #{tpu_custom_call.1} parent=1 // pred_region
      _
    $region17: #{tpu_custom_call.1} parent=1 // pred_fallthru
      _
    // Predicated region
    $region18: #{tpu_custom_call.1} parent=1 // pred_check
      _
    $region19: #{tpu_custom_call.1} parent=1 // pred_check_branch
      %26 = sbr.rel (0) target = $region21
    $region20: #{tpu_custom_call.1} parent=1 // pred_region
      _
    $region21: #{tpu_custom_call.1} parent=1 // pred_fallthru
      _
    // Predicated region
    $region22: #{tpu_custom_call.1} parent=1 // pred_check
      _
    $region23: #{tpu_custom_call.1} parent=1 // pred_check_branch
      %28 = sbr.rel (0) target = $region25
    $region24: #{tpu_custom_call.1} parent=1 // pred_region
      _
    $region25: #{tpu_custom_call.1} parent=1 // pred_fallthru
      _
    // Predicated region
    $region26: #{tpu_custom_call.1} parent=1 // pred_check
      _
    $region27: #{tpu_custom_call.1} parent=1 // pred_check_branch
      %30 = sbr.rel (0) target = $region29
    $region28: #{tpu_custom_call.1} parent=1 // pred_region
      _
    $region29: #{tpu_custom_call.1} parent=1 // pred_fallthru
      _
    // Predicated region
    $region30: #{tpu_custom_call.1} parent=1 // pred_check
      _
    $region31: #{tpu_custom_call.1} parent=1 // pred_check_branch
      %32 = sbr.rel (0) target = $region33
    $region32: #{tpu_custom_call.1} parent=1 // pred_region
      _
    $region33: #{tpu_custom_call.1} parent=1 // pred_fallthru
      _
    // Predicated region
    $region34: #{tpu_custom_call.1} parent=1 // pred_check
      _
    $region35: #{tpu_custom_call.1} parent=1 // pred_check_branch
      %34 = sbr.rel (0) target = $region37
    $region36: #{tpu_custom_call.1} parent=1 // pred_region
      _
    $region37: #{tpu_custom_call.1} parent=1 // pred_fallthru
      _
    %v35 = vld [vmem:[%s0] sm:$0x3]
    %v36 = vld [vmem:[%s1] sm:$0xff]
    %v37 = vld [vmem:[%s1 + $0x8] sm:$0xff]
    %v38 = vld [vmem:[%s1 + $0x10] sm:$0xff]
    %v39 = vld [vmem:[%s1 + $0x18] sm:$0xff]
    %v40 = vld [vmem:[%s1 + $0x20] sm:$0xff]
    %v41 = vld [vmem:[%s1 + $0x28] sm:$0xff]
    %v42 = vld [vmem:[%s1 + $0x30] sm:$0xff]
    %v43 = vld [vmem:[%s1 + $0x38] sm:$0xff]
    %v44 = vld [vmem:[%s1 + $0x40] sm:$0xff]
    %v45 = vld [vmem:[%s1 + $0x48] sm:$0xff]
    %v46 = vld [vmem:[%s1 + $0x50] sm:$0xff]
    %v47 = vld [vmem:[%s1 + $0x58] sm:$0xff]
    %v48 = vld [vmem:[%s1 + $0x60] sm:$0xff]
    %v49 = vld [vmem:[%s1 + $0x68] sm:$0xff]
    %v50 = vld [vmem:[%s1 + $0x70] sm:$0xff]
    %v51 = vld [vmem:[%s1 + $0x78] sm:$0xff]
    %53 = vset.pattern.permute.xlu0 0
    %54 = vperm.xlu0 %53, %v36
    %v55 = vpop.permute.xlu0 %54
    %58 = vset.pattern.permute.xlu0 0
    %59 = vperm.xlu0 %58, %v37
    %v60 = vpop.permute.xlu0 %59
    %63 = vset.pattern.permute.xlu0 0
    %64 = vperm.xlu0 %63, %v38
    %v65 = vpop.permute.xlu0 %64
    %68 = vset.pattern.permute.xlu0 0
    %69 = vperm.xlu0 %68, %v39
    %v70 = vpop.permute.xlu0 %69
    %73 = vset.pattern.permute.xlu0 0
    %74 = vperm.xlu0 %73, %v40
    %v75 = vpop.permute.xlu0 %74
    %78 = vset.pattern.permute.xlu0 0
    %79 = vperm.xlu0 %78, %v41
    %v80 = vpop.permute.xlu0 %79
    %83 = vset.pattern.permute.xlu0 0
    %84 = vperm.xlu0 %83, %v42
    %v85 = vpop.permute.xlu0 %84
    %88 = vset.pattern.permute.xlu0 0
    %89 = vperm.xlu0 %88, %v43
    %v90 = vpop.permute.xlu0 %89
    %93 = vset.pattern.permute.xlu0 0
    %94 = vperm.xlu0 %93, %v44
    %v95 = vpop.permute.xlu0 %94
    %98 = vset.pattern.permute.xlu0 0
    %99 = vperm.xlu0 %98, %v45
    %v100 = vpop.permute.xlu0 %99
    %103 = vset.pattern.permute.xlu0 0
    %104 = vperm.xlu0 %103, %v46
    %v105 = vpop.permute.xlu0 %104
    %108 = vset.pattern.permute.xlu0 0
    %109 = vperm.xlu0 %108, %v47
    %v110 = vpop.permute.xlu0 %109
    %113 = vset.pattern.permute.xlu0 0
    %114 = vperm.xlu0 %113, %v48
    %v115 = vpop.permute.xlu0 %114
    %118 = vset.pattern.permute.xlu0 0
    %119 = vperm.xlu0 %118, %v49
    %v120 = vpop.permute.xlu0 %119
    %123 = vset.pattern.permute.xlu0 0
    %124 = vperm.xlu0 %123, %v50
    %v125 = vpop.permute.xlu0 %124
    %128 = vset.pattern.permute.xlu0 0
    %129 = vperm.xlu0 %128, %v51
    %v130 = vpop.permute.xlu0 %129
    %v133 = vlaneseq
    %v134 = vshrl.u32 %v133, 7
    %v135 = vsub.s32 0, %v134
    %v136 = vrot.slane %v35, %v135
    %v137 = vlaneseq
    %v138 = vshrl.u32 %v137, 7
    %v139 = vsub.s32 1, %v138
    %v140 = vrot.slane %v35, %v139
    %v143 = vmul.f32 %v55, %v136
    %v144 = vmul.f32 %v55, %v140
    %v145 = vmul.f32 %v60, %v136
    %v146 = vmul.f32 %v60, %v140
    %v147 = vmul.f32 %v65, %v136
    %v148 = vmul.f32 %v65, %v140
    %v149 = vmul.f32 %v70, %v136
    %v150 = vmul.f32 %v70, %v140
    %v151 = vmul.f32 %v75, %v136
    %v152 = vmul.f32 %v75, %v140
    %v153 = vmul.f32 %v80, %v136
    %v154 = vmul.f32 %v80, %v140
    %v155 = vmul.f32 %v85, %v136
    %v156 = vmul.f32 %v85, %v140
    %v157 = vmul.f32 %v90, %v136
    %v158 = vmul.f32 %v90, %v140
    %v159 = vmul.f32 %v95, %v136
    %v160 = vmul.f32 %v95, %v140
    %v161 = vmul.f32 %v100, %v136
    %v162 = vmul.f32 %v100, %v140
    %v163 = vmul.f32 %v105, %v136
    %v164 = vmul.f32 %v105, %v140
    %v165 = vmul.f32 %v110, %v136
    %v166 = vmul.f32 %v110, %v140
    %v167 = vmul.f32 %v115, %v136
    %v168 = vmul.f32 %v115, %v140
    %v169 = vmul.f32 %v120, %v136
    %v170 = vmul.f32 %v120, %v140
    %v171 = vmul.f32 %v125, %v136
    %v172 = vmul.f32 %v125, %v140
    %v173 = vmul.f32 %v130, %v136
    %v174 = vmul.f32 %v130, %v140
    %v175 = vld [vmem:[%s2] sm:$0xff]
    %v176 = vld [vmem:[%s2 + $0x8] sm:$0xff]
    %v177 = vld [vmem:[%s2 + $0x10] sm:$0xff]
    %v178 = vld [vmem:[%s2 + $0x18] sm:$0xff]
    %v179 = vld [vmem:[%s2 + $0x20] sm:$0xff]
    %v180 = vld [vmem:[%s2 + $0x28] sm:$0xff]
    %v181 = vld [vmem:[%s2 + $0x30] sm:$0xff]
    %v182 = vld [vmem:[%s2 + $0x38] sm:$0xff]
    %v183 = vld [vmem:[%s2 + $0x40] sm:$0xff]
    %v184 = vld [vmem:[%s2 + $0x48] sm:$0xff]
    %v185 = vld [vmem:[%s2 + $0x50] sm:$0xff]
    %v186 = vld [vmem:[%s2 + $0x58] sm:$0xff]
    %v187 = vld [vmem:[%s2 + $0x60] sm:$0xff]
    %v188 = vld [vmem:[%s2 + $0x68] sm:$0xff]
    %v189 = vld [vmem:[%s2 + $0x70] sm:$0xff]
    %v190 = vld [vmem:[%s2 + $0x78] sm:$0xff]
    %192 = vset.pattern.permute.xlu0 0
    %193 = vperm.xlu0 %192, %v175
    %v194 = vpop.permute.xlu0 %193
    %197 = vset.pattern.permute.xlu0 0
    %198 = vperm.xlu0 %197, %v176
    %v199 = vpop.permute.xlu0 %198
    %202 = vset.pattern.permute.xlu0 0
    %203 = vperm.xlu0 %202, %v177
    %v204 = vpop.permute.xlu0 %203
    %207 = vset.pattern.permute.xlu0 0
    %208 = vperm.xlu0 %207, %v178
    %v209 = vpop.permute.xlu0 %208
    %212 = vset.pattern.permute.xlu0 0
    %213 = vperm.xlu0 %212, %v179
    %v214 = vpop.permute.xlu0 %213
    %217 = vset.pattern.permute.xlu0 0
    %218 = vperm.xlu0 %217, %v180
    %v219 = vpop.permute.xlu0 %218
    %222 = vset.pattern.permute.xlu0 0
    %223 = vperm.xlu0 %222, %v181
    %v224 = vpop.permute.xlu0 %223
    %227 = vset.pattern.permute.xlu0 0
    %228 = vperm.xlu0 %227, %v182
    %v229 = vpop.permute.xlu0 %228
    %232 = vset.pattern.permute.xlu0 0
    %233 = vperm.xlu0 %232, %v183
    %v234 = vpop.permute.xlu0 %233
    %237 = vset.pattern.permute.xlu0 0
    %238 = vperm.xlu0 %237, %v184
    %v239 = vpop.permute.xlu0 %238
    %242 = vset.pattern.permute.xlu0 0
    %243 = vperm.xlu0 %242, %v185
    %v244 = vpop.permute.xlu0 %243
    %247 = vset.pattern.permute.xlu0 0
    %248 = vperm.xlu0 %247, %v186
    %v249 = vpop.permute.xlu0 %248
    %252 = vset.pattern.permute.xlu0 0
    %253 = vperm.xlu0 %252, %v187
    %v254 = vpop.permute.xlu0 %253
    %257 = vset.pattern.permute.xlu0 0
    %258 = vperm.xlu0 %257, %v188
    %v259 = vpop.permute.xlu0 %258
    %262 = vset.pattern.permute.xlu0 0
    %263 = vperm.xlu0 %262, %v189
    %v264 = vpop.permute.xlu0 %263
    %267 = vset.pattern.permute.xlu0 0
    %268 = vperm.xlu0 %267, %v190
    %v269 = vpop.permute.xlu0 %268
    %v271 = vadd.f32 %v143, %v194
    %v272 = vadd.f32 %v144, %v194
    %v273 = vadd.f32 %v145, %v199
    %v274 = vadd.f32 %v146, %v199
    %v275 = vadd.f32 %v147, %v204
    %v276 = vadd.f32 %v148, %v204
    %v277 = vadd.f32 %v149, %v209
    %v278 = vadd.f32 %v150, %v209
    %v279 = vadd.f32 %v151, %v214
    %v280 = vadd.f32 %v152, %v214
    %v281 = vadd.f32 %v153, %v219
    %v282 = vadd.f32 %v154, %v219
    %v283 = vadd.f32 %v155, %v224
    %v284 = vadd.f32 %v156, %v224
    %v285 = vadd.f32 %v157, %v229
    %v286 = vadd.f32 %v158, %v229
    %v287 = vadd.f32 %v159, %v234
    %v288 = vadd.f32 %v160, %v234
    %v289 = vadd.f32 %v161, %v239
    %v290 = vadd.f32 %v162, %v239
    %v291 = vadd.f32 %v163, %v244
    %v292 = vadd.f32 %v164, %v244
    %v293 = vadd.f32 %v165, %v249
    %v294 = vadd.f32 %v166, %v249
    %v295 = vadd.f32 %v167, %v254
    %v296 = vadd.f32 %v168, %v254
    %v297 = vadd.f32 %v169, %v259
    %v298 = vadd.f32 %v170, %v259
    %v299 = vadd.f32 %v171, %v264
    %v300 = vadd.f32 %v172, %v264
    %v301 = vadd.f32 %v173, %v269
    %v302 = vadd.f32 %v174, %v269
    %v303 = vmax.f32 %v271, 0.0
    %v304 = vmax.f32 %v272, 0.0
    %v305 = vmax.f32 %v273, 0.0
    %v306 = vmax.f32 %v274, 0.0
    %v307 = vmax.f32 %v275, 0.0
    %v308 = vmax.f32 %v276, 0.0
    %v309 = vmax.f32 %v277, 0.0
    %v310 = vmax.f32 %v278, 0.0
    %v311 = vmax.f32 %v279, 0.0
    %v312 = vmax.f32 %v280, 0.0
    %v313 = vmax.f32 %v281, 0.0
    %v314 = vmax.f32 %v282, 0.0
    %v315 = vmax.f32 %v283, 0.0
    %v316 = vmax.f32 %v284, 0.0
    %v317 = vmax.f32 %v285, 0.0
    %v318 = vmax.f32 %v286, 0.0
    %v319 = vmax.f32 %v287, 0.0
    %v320 = vmax.f32 %v288, 0.0
    %v321 = vmax.f32 %v289, 0.0
    %v322 = vmax.f32 %v290, 0.0
    %v323 = vmax.f32 %v291, 0.0
    %v324 = vmax.f32 %v292, 0.0
    %v325 = vmax.f32 %v293, 0.0
    %v326 = vmax.f32 %v294, 0.0
    %v327 = vmax.f32 %v295, 0.0
    %v328 = vmax.f32 %v296, 0.0
    %v329 = vmax.f32 %v297, 0.0
    %v330 = vmax.f32 %v298, 0.0
    %v331 = vmax.f32 %v299, 0.0
    %v332 = vmax.f32 %v300, 0.0
    %v333 = vmax.f32 %v301, 0.0
    %v334 = vmax.f32 %v302, 0.0
    %v335 = vld [vmem:[%s3] sm:$0xff]
    %v336 = vld [vmem:[%s3 + $0x8] sm:$0xff]
    %v337 = vld [vmem:[%s3 + $0x10] sm:$0xff]
    %v338 = vld [vmem:[%s3 + $0x18] sm:$0xff]
    %v339 = vld [vmem:[%s3 + $0x20] sm:$0xff]
    %v340 = vld [vmem:[%s3 + $0x28] sm:$0xff]
    %v341 = vld [vmem:[%s3 + $0x30] sm:$0xff]
    %v342 = vld [vmem:[%s3 + $0x38] sm:$0xff]
    %v343 = vld [vmem:[%s3 + $0x40] sm:$0xff]
    %v344 = vld [vmem:[%s3 + $0x48] sm:$0xff]
    %v345 = vld [vmem:[%s3 + $0x50] sm:$0xff]
    %v346 = vld [vmem:[%s3 + $0x58] sm:$0xff]
    %v347 = vld [vmem:[%s3 + $0x60] sm:$0xff]
    %v348 = vld [vmem:[%s3 + $0x68] sm:$0xff]
    %v349 = vld [vmem:[%s3 + $0x70] sm:$0xff]
    %v350 = vld [vmem:[%s3 + $0x78] sm:$0xff]
    %v351 = vld [vmem:[%s4] sm:$0xff]
    %v352 = vld [vmem:[%s4 + $0x8] sm:$0xff]
    %v353 = vld [vmem:[%s4 + $0x10] sm:$0xff]
    %v354 = vld [vmem:[%s4 + $0x18] sm:$0xff]
    %v355 = vld [vmem:[%s4 + $0x20] sm:$0xff]
    %v356 = vld [vmem:[%s4 + $0x28] sm:$0xff]
    %v357 = vld [vmem:[%s4 + $0x30] sm:$0xff]
    %v358 = vld [vmem:[%s4 + $0x38] sm:$0xff]
    %v359 = vld [vmem:[%s4 + $0x40] sm:$0xff]
    %v360 = vld [vmem:[%s4 + $0x48] sm:$0xff]
    %v361 = vld [vmem:[%s4 + $0x50] sm:$0xff]
    %v362 = vld [vmem:[%s4 + $0x58] sm:$0xff]
    %v363 = vld [vmem:[%s4 + $0x60] sm:$0xff]
    %v364 = vld [vmem:[%s4 + $0x68] sm:$0xff]
    %v365 = vld [vmem:[%s4 + $0x70] sm:$0xff]
    %v366 = vld [vmem:[%s4 + $0x78] sm:$0xff]
    %368 = vset.pattern.permute.xlu0 0
    %369 = vperm.xlu0 %368, %v351
    %v370 = vpop.permute.xlu0 %369
    %373 = vset.pattern.permute.xlu0 0
    %374 = vperm.xlu0 %373, %v352
    %v375 = vpop.permute.xlu0 %374
    %378 = vset.pattern.permute.xlu0 0
    %379 = vperm.xlu0 %378, %v353
    %v380 = vpop.permute.xlu0 %379
    %383 = vset.pattern.permute.xlu0 0
    %384 = vperm.xlu0 %383, %v354
    %v385 = vpop.permute.xlu0 %384
    %388 = vset.pattern.permute.xlu0 0
    %389 = vperm.xlu0 %388, %v355
    %v390 = vpop.permute.xlu0 %389
    %393 = vset.pattern.permute.xlu0 0
    %394 = vperm.xlu0 %393, %v356
    %v395 = vpop.permute.xlu0 %394
    %398 = vset.pattern.permute.xlu0 0
    %399 = vperm.xlu0 %398, %v357
    %v400 = vpop.permute.xlu0 %399
    %403 = vset.pattern.permute.xlu0 0
    %404 = vperm.xlu0 %403, %v358
    %v405 = vpop.permute.xlu0 %404
    %408 = vset.pattern.permute.xlu0 0
    %409 = vperm.xlu0 %408, %v359
    %v410 = vpop.permute.xlu0 %409
    %413 = vset.pattern.permute.xlu0 0
    %414 = vperm.xlu0 %413, %v360
    %v415 = vpop.permute.xlu0 %414
    %418 = vset.pattern.permute.xlu0 0
    %419 = vperm.xlu0 %418, %v361
    %v420 = vpop.permute.xlu0 %419
    %423 = vset.pattern.permute.xlu0 0
    %424 = vperm.xlu0 %423, %v362
    %v425 = vpop.permute.xlu0 %424
    %428 = vset.pattern.permute.xlu0 0
    %429 = vperm.xlu0 %428, %v363
    %v430 = vpop.permute.xlu0 %429
    %433 = vset.pattern.permute.xlu0 0
    %434 = vperm.xlu0 %433, %v364
    %v435 = vpop.permute.xlu0 %434
    %438 = vset.pattern.permute.xlu0 0
    %439 = vperm.xlu0 %438, %v365
    %v440 = vpop.permute.xlu0 %439
    %443 = vset.pattern.permute.xlu0 0
    %444 = vperm.xlu0 %443, %v366
    %v445 = vpop.permute.xlu0 %444
    %447 = vmatprep.subr.mxu0 %v304
    %448 = vmatpush1.msra.mxu0 %v303
    %449 = vmatprep.subr.mxu0 %v306
    %450 = vmatpush1.msra.mxu0 %v305
    %451 = vmatprep.subr.mxu0 %v308
    %452 = vmatpush1.msra.mxu0 %v307
    %453 = vmatprep.subr.mxu0 %v310
    %454 = vmatpush1.msra.mxu0 %v309
    %455 = vmatprep.subr.mxu0 %v312
    %456 = vmatpush1.msra.mxu0 %v311
    %457 = vmatprep.subr.mxu0 %v314
    %458 = vmatpush1.msra.mxu0 %v313
    %459 = vmatprep.subr.mxu0 %v316
    %460 = vmatpush1.msra.mxu0 %v315
    %461 = vmatprep.subr.mxu0 %v318
    %462 = vmatpush1.msra.mxu0 %v317
    %463 = vmatprep.subr.mxu0 %v320
    %464 = vmatpush1.msra.mxu0 %v319
    %465 = vmatprep.subr.mxu0 %v322
    %466 = vmatpush1.msra.mxu0 %v321
    %467 = vmatprep.subr.mxu0 %v324
    %468 = vmatpush1.msra.mxu0 %v323
    %469 = vmatprep.subr.mxu0 %v326
    %470 = vmatpush1.msra.mxu0 %v325
    %471 = vmatprep.subr.mxu0 %v328
    %472 = vmatpush1.msra.mxu0 %v327
    %473 = vmatprep.subr.mxu0 %v330
    %474 = vmatpush1.msra.mxu0 %v329
    %475 = vmatprep.subr.mxu0 %v332
    %476 = vmatpush1.msra.mxu0 %v331
    %477 = vmatprep.subr.mxu0 %v334
    %478 = vmatpush1.msra.mxu0 %v333
    %479 = vmatprep.subr.mxu0 0.0
    %480 = vmatpush1.msra.mxu0 0.0
    %481 = vmatprep.subr.mxu0 0.0
    %482 = vmatpush1.msra.mxu0 0.0
    %483 = vmatprep.subr.mxu0 0.0
    %484 = vmatpush1.msra.mxu0 0.0
    %485 = vmatprep.subr.mxu0 0.0
    %486 = vmatpush1.msra.mxu0 0.0
    %487 = vmatprep.subr.mxu0 0.0
    %488 = vmatpush1.msra.mxu0 0.0
    %489 = vmatprep.subr.mxu0 0.0
    %490 = vmatpush1.msra.mxu0 0.0
    %491 = vmatprep.subr.mxu0 0.0
    %492 = vmatpush1.msra.mxu0 0.0
    %493 = vmatprep.subr.mxu0 0.0
    %494 = vmatpush1.msra.mxu0 0.0
    %495 = vmatprep.subr.mxu0 0.0
    %496 = vmatpush1.msra.mxu0 0.0
    %497 = vmatprep.subr.mxu0 0.0
    %498 = vmatpush1.msra.mxu0 0.0
    %499 = vmatprep.subr.mxu0 0.0
    %500 = vmatpush1.msra.mxu0 0.0
    %501 = vmatprep.subr.mxu0 0.0
    %502 = vmatpush1.msra.mxu0 0.0
    %503 = vmatprep.subr.mxu0 0.0
    %504 = vmatpush1.msra.mxu0 0.0
    %505 = vmatprep.subr.mxu0 0.0
    %506 = vmatpush1.msra.mxu0 0.0
    %507 = vmatprep.subr.mxu0 0.0
    %508 = vmatpush1.msra.mxu0 0.0
    %509 = vmatprep.subr.mxu0 0.0
    %510 = vmatpush1.msra.mxu0 0.0
    %511 = vmatprep.mubr.f32.mxu0 0.0
    %512 = vmatmul.mubr.f32.gmra.mrb[0].mxu0 %v335
    %v513 = vpop.f32.mrb[0].mxu0
    %v514 = vadd.f32 %v370, %v513
    %v515 = vpop.f32.mrb[0].mxu0
    %v516 = vadd.f32 %v370, %v515
    %517 = vmatprep.mubr.f32.mxu0 0.0
    %518 = vmatmul.mubr.f32.gmra.mrb[0].mxu0 %v336
    %v519 = vpop.f32.mrb[0].mxu0
    %v520 = vadd.f32 %v375, %v519
    %v521 = vpop.f32.mrb[0].mxu0
    %v522 = vadd.f32 %v375, %v521
    %523 = vmatprep.mubr.f32.mxu0 0.0
    %524 = vmatmul.mubr.f32.gmra.mrb[0].mxu0 %v337
    %v525 = vpop.f32.mrb[0].mxu0
    %v526 = vadd.f32 %v380, %v525
    %v527 = vpop.f32.mrb[0].mxu0
    %v528 = vadd.f32 %v380, %v527
    %529 = vmatprep.mubr.f32.mxu0 0.0
    %530 = vmatmul.mubr.f32.gmra.mrb[0].mxu0 %v338
    %v531 = vpop.f32.mrb[0].mxu0
    %v532 = vadd.f32 %v385, %v531
    %v533 = vpop.f32.mrb[0].mxu0
    %v534 = vadd.f32 %v385, %v533
    %535 = vmatprep.mubr.f32.mxu0 0.0
    %536 = vmatmul.mubr.f32.gmra.mrb[0].mxu0 %v339
    %v537 = vpop.f32.mrb[0].mxu0
    %v538 = vadd.f32 %v390, %v537
    %v539 = vpop.f32.mrb[0].mxu0
    %v540 = vadd.f32 %v390, %v539
    %541 = vmatprep.mubr.f32.mxu0 0.0
    %542 = vmatmul.mubr.f32.gmra.mrb[0].mxu0 %v340
    %v543 = vpop.f32.mrb[0].mxu0
    %v544 = vadd.f32 %v395, %v543
    %v545 = vpop.f32.mrb[0].mxu0
    %v546 = vadd.f32 %v395, %v545
    %547 = vmatprep.mubr.f32.mxu0 0.0
    %548 = vmatmul.mubr.f32.gmra.mrb[0].mxu0 %v341
    %v549 = vpop.f32.mrb[0].mxu0
    %v550 = vadd.f32 %v400, %v549
    %v551 = vpop.f32.mrb[0].mxu0
    %v552 = vadd.f32 %v400, %v551
    %553 = vmatprep.mubr.f32.mxu0 0.0
    %554 = vmatmul.mubr.f32.gmra.mrb[0].mxu0 %v342
    %v555 = vpop.f32.mrb[0].mxu0
    %v556 = vadd.f32 %v405, %v555
    %v557 = vpop.f32.mrb[0].mxu0
    %v558 = vadd.f32 %v405, %v557
    %559 = vmatprep.mubr.f32.mxu0 0.0
    %560 = vmatmul.mubr.f32.gmra.mrb[0].mxu0 %v343
    %v561 = vpop.f32.mrb[0].mxu0
    %v562 = vadd.f32 %v410, %v561
    %v563 = vpop.f32.mrb[0].mxu0
    %v564 = vadd.f32 %v410, %v563
    %565 = vmatprep.mubr.f32.mxu0 0.0
    %566 = vmatmul.mubr.f32.gmra.mrb[0].mxu0 %v344
    %v567 = vpop.f32.mrb[0].mxu0
    %v568 = vadd.f32 %v415, %v567
    %v569 = vpop.f32.mrb[0].mxu0
    %v570 = vadd.f32 %v415, %v569
    %571 = vmatprep.mubr.f32.mxu0 0.0
    %572 = vmatmul.mubr.f32.gmra.mrb[0].mxu0 %v345
    %v573 = vpop.f32.mrb[0].mxu0
    %v574 = vadd.f32 %v420, %v573
    %v575 = vpop.f32.mrb[0].mxu0
    %v576 = vadd.f32 %v420, %v575
    %577 = vmatprep.mubr.f32.mxu0 0.0
    %578 = vmatmul.mubr.f32.gmra.mrb[0].mxu0 %v346
    %v579 = vpop.f32.mrb[0].mxu0
    %v580 = vadd.f32 %v425, %v579
    %v581 = vpop.f32.mrb[0].mxu0
    %v582 = vadd.f32 %v425, %v581
    %583 = vmatprep.mubr.f32.mxu0 0.0
    %584 = vmatmul.mubr.f32.gmra.mrb[0].mxu0 %v347
    %v585 = vpop.f32.mrb[0].mxu0
    %v586 = vadd.f32 %v430, %v585
    %v587 = vpop.f32.mrb[0].mxu0
    %v588 = vadd.f32 %v430, %v587
    %589 = vmatprep.mubr.f32.mxu0 0.0
    %590 = vmatmul.mubr.f32.gmra.mrb[0].mxu0 %v348
    %v591 = vpop.f32.mrb[0].mxu0
    %v592 = vadd.f32 %v435, %v591
    %v593 = vpop.f32.mrb[0].mxu0
    %v594 = vadd.f32 %v435, %v593
    %595 = vmatprep.mubr.f32.mxu0 0.0
    %596 = vmatmul.mubr.f32.gmra.mrb[0].mxu0 %v349
    %v597 = vpop.f32.mrb[0].mxu0
    %v598 = vadd.f32 %v440, %v597
    %v599 = vpop.f32.mrb[0].mxu0
    %v600 = vadd.f32 %v440, %v599
    %601 = vmatprep.mubr.f32.mxu0 0.0
    %602 = vmatmul.mubr.f32.gmra.mrb[0].mxu0 %v350
    %v603 = vpop.f32.mrb[0].mxu0
    %v604 = vadd.f32 %v445, %v603
    %v605 = vpop.f32.mrb[0].mxu0
    %v606 = vadd.f32 %v445, %v605
    %607 = vdwg.mxu0
    %v608 = vmax.f32 %v514, 0.0
    %v609 = vmax.f32 %v516, 0.0
    %v610 = vmax.f32 %v520, 0.0
    %v611 = vmax.f32 %v522, 0.0
    %v612 = vmax.f32 %v526, 0.0
    %v613 = vmax.f32 %v528, 0.0
    %v614 = vmax.f32 %v532, 0.0
    %v615 = vmax.f32 %v534, 0.0
    %v616 = vmax.f32 %v538, 0.0
    %v617 = vmax.f32 %v540, 0.0
    %v618 = vmax.f32 %v544, 0.0
    %v619 = vmax.f32 %v546, 0.0
    %v620 = vmax.f32 %v550, 0.0
    %v621 = vmax.f32 %v552, 0.0
    %v622 = vmax.f32 %v556, 0.0
    %v623 = vmax.f32 %v558, 0.0
    %v624 = vmax.f32 %v562, 0.0
    %v625 = vmax.f32 %v564, 0.0
    %v626 = vmax.f32 %v568, 0.0
    %v627 = vmax.f32 %v570, 0.0
    %v628 = vmax.f32 %v574, 0.0
    %v629 = vmax.f32 %v576, 0.0
    %v630 = vmax.f32 %v580, 0.0
    %v631 = vmax.f32 %v582, 0.0
    %v632 = vmax.f32 %v586, 0.0
    %v633 = vmax.f32 %v588, 0.0
    %v634 = vmax.f32 %v592, 0.0
    %v635 = vmax.f32 %v594, 0.0
    %v636 = vmax.f32 %v598, 0.0
    %v637 = vmax.f32 %v600, 0.0
    %v638 = vmax.f32 %v604, 0.0
    %v639 = vmax.f32 %v606, 0.0
    %v640 = vld [vmem:[%s5] sm:$0xff]
    %v641 = vld [vmem:[%s5 + $0x8] sm:$0xff]
    %v642 = vld [vmem:[%s5 + $0x10] sm:$0xff]
    %v643 = vld [vmem:[%s5 + $0x18] sm:$0xff]
    %v644 = vld [vmem:[%s5 + $0x20] sm:$0xff]
    %v645 = vld [vmem:[%s5 + $0x28] sm:$0xff]
    %v646 = vld [vmem:[%s5 + $0x30] sm:$0xff]
    %v647 = vld [vmem:[%s5 + $0x38] sm:$0xff]
    %v648 = vld [vmem:[%s5 + $0x40] sm:$0xff]
    %v649 = vld [vmem:[%s5 + $0x48] sm:$0xff]
    %v650 = vld [vmem:[%s5 + $0x50] sm:$0xff]
    %v651 = vld [vmem:[%s5 + $0x58] sm:$0xff]
    %v652 = vld [vmem:[%s5 + $0x60] sm:$0xff]
    %v653 = vld [vmem:[%s5 + $0x68] sm:$0xff]
    %v654 = vld [vmem:[%s5 + $0x70] sm:$0xff]
    %v655 = vld [vmem:[%s5 + $0x78] sm:$0xff]
    %v656 = vld [vmem:[%s6] sm:$0xff]
    %v657 = vld [vmem:[%s6 + $0x8] sm:$0xff]
    %v658 = vld [vmem:[%s6 + $0x10] sm:$0xff]
    %v659 = vld [vmem:[%s6 + $0x18] sm:$0xff]
    %v660 = vld [vmem:[%s6 + $0x20] sm:$0xff]
    %v661 = vld [vmem:[%s6 + $0x28] sm:$0xff]
    %v662 = vld [vmem:[%s6 + $0x30] sm:$0xff]
    %v663 = vld [vmem:[%s6 + $0x38] sm:$0xff]
    %v664 = vld [vmem:[%s6 + $0x40] sm:$0xff]
    %v665 = vld [vmem:[%s6 + $0x48] sm:$0xff]
    %v666 = vld [vmem:[%s6 + $0x50] sm:$0xff]
    %v667 = vld [vmem:[%s6 + $0x58] sm:$0xff]
    %v668 = vld [vmem:[%s6 + $0x60] sm:$0xff]
    %v669 = vld [vmem:[%s6 + $0x68] sm:$0xff]
    %v670 = vld [vmem:[%s6 + $0x70] sm:$0xff]
    %v671 = vld [vmem:[%s6 + $0x78] sm:$0xff]
    %673 = vset.pattern.permute.xlu0 0
    %674 = vperm.xlu0 %673, %v656
    %v675 = vpop.permute.xlu0 %674
    %678 = vset.pattern.permute.xlu0 0
    %679 = vperm.xlu0 %678, %v657
    %v680 = vpop.permute.xlu0 %679
    %683 = vset.pattern.permute.xlu0 0
    %684 = vperm.xlu0 %683, %v658
    %v685 = vpop.permute.xlu0 %684
    %688 = vset.pattern.permute.xlu0 0
    %689 = vperm.xlu0 %688, %v659
    %v690 = vpop.permute.xlu0 %689
    %693 = vset.pattern.permute.xlu0 0
    %694 = vperm.xlu0 %693, %v660
    %v695 = vpop.permute.xlu0 %694
    %698 = vset.pattern.permute.xlu0 0
    %699 = vperm.xlu0 %698, %v661
    %v700 = vpop.permute.xlu0 %699
    %703 = vset.pattern.permute.xlu0 0
    %704 = vperm.xlu0 %703, %v662
    %v705 = vpop.permute.xlu0 %704
    %708 = vset.pattern.permute.xlu0 0
    %709 = vperm.xlu0 %708, %v663
    %v710 = vpop.permute.xlu0 %709
    %713 = vset.pattern.permute.xlu0 0
    %714 = vperm.xlu0 %713, %v664
    %v715 = vpop.permute.xlu0 %714
    %718 = vset.pattern.permute.xlu0 0
    %719 = vperm.xlu0 %718, %v665
    %v720 = vpop.permute.xlu0 %719
    %723 = vset.pattern.permute.xlu0 0
    %724 = vperm.xlu0 %723, %v666
    %v725 = vpop.permute.xlu0 %724
    %728 = vset.pattern.permute.xlu0 0
    %729 = vperm.xlu0 %728, %v667
    %v730 = vpop.permute.xlu0 %729
    %733 = vset.pattern.permute.xlu0 0
    %734 = vperm.xlu0 %733, %v668
    %v735 = vpop.permute.xlu0 %734
    %738 = vset.pattern.permute.xlu0 0
    %739 = vperm.xlu0 %738, %v669
    %v740 = vpop.permute.xlu0 %739
    %743 = vset.pattern.permute.xlu0 0
    %744 = vperm.xlu0 %743, %v670
    %v745 = vpop.permute.xlu0 %744
    %748 = vset.pattern.permute.xlu0 0
    %749 = vperm.xlu0 %748, %v671
    %v750 = vpop.permute.xlu0 %749
    %752 = vmatprep.subr.mxu0 %v609
    %753 = vmatpush1.msra.mxu0 %v608
    %754 = vmatprep.subr.mxu0 %v611
    %755 = vmatpush1.msra.mxu0 %v610
    %756 = vmatprep.subr.mxu0 %v613
    %757 = vmatpush1.msra.mxu0 %v612
    %758 = vmatprep.subr.mxu0 %v615
    %759 = vmatpush1.msra.mxu0 %v614
    %760 = vmatprep.subr.mxu0 %v617
    %761 = vmatpush1.msra.mxu0 %v616
    %762 = vmatprep.subr.mxu0 %v619
    %763 = vmatpush1.msra.mxu0 %v618
    %764 = vmatprep.subr.mxu0 %v621
    %765 = vmatpush1.msra.mxu0 %v620
    %766 = vmatprep.subr.mxu0 %v623
    %767 = vmatpush1.msra.mxu0 %v622
    %768 = vmatprep.subr.mxu0 %v625
    %769 = vmatpush1.msra.mxu0 %v624
    %770 = vmatprep.subr.mxu0 %v627
    %771 = vmatpush1.msra.mxu0 %v626
    %772 = vmatprep.subr.mxu0 %v629
    %773 = vmatpush1.msra.mxu0 %v628
    %774 = vmatprep.subr.mxu0 %v631
    %775 = vmatpush1.msra.mxu0 %v630
    %776 = vmatprep.subr.mxu0 %v633
    %777 = vmatpush1.msra.mxu0 %v632
    %778 = vmatprep.subr.mxu0 %v635
    %779 = vmatpush1.msra.mxu0 %v634
    %780 = vmatprep.subr.mxu0 %v637
    %781 = vmatpush1.msra.mxu0 %v636
    %782 = vmatprep.subr.mxu0 %v639
    %783 = vmatpush1.msra.mxu0 %v638
    %784 = vmatprep.subr.mxu0 0.0
    %785 = vmatpush1.msra.mxu0 0.0
    %786 = vmatprep.subr.mxu0 0.0
    %787 = vmatpush1.msra.mxu0 0.0
    %788 = vmatprep.subr.mxu0 0.0
    %789 = vmatpush1.msra.mxu0 0.0
    %790 = vmatprep.subr.mxu0 0.0
    %791 = vmatpush1.msra.mxu0 0.0
    %792 = vmatprep.subr.mxu0 0.0
    %793 = vmatpush1.msra.mxu0 0.0
    %794 = vmatprep.subr.mxu0 0.0
    %795 = vmatpush1.msra.mxu0 0.0
    %796 = vmatprep.subr.mxu0 0.0
    %797 = vmatpush1.msra.mxu0 0.0
    %798 = vmatprep.subr.mxu0 0.0
    %799 = vmatpush1.msra.mxu0 0.0
    %800 = vmatprep.subr.mxu0 0.0
    %801 = vmatpush1.msra.mxu0 0.0
    %802 = vmatprep.subr.mxu0 0.0
    %803 = vmatpush1.msra.mxu0 0.0
    %804 = vmatprep.subr.mxu0 0.0
    %805 = vmatpush1.msra.mxu0 0.0
    %806 = vmatprep.subr.mxu0 0.0
    %807 = vmatpush1.msra.mxu0 0.0
    %808 = vmatprep.subr.mxu0 0.0
    %809 = vmatpush1.msra.mxu0 0.0
    %810 = vmatprep.subr.mxu0 0.0
    %811 = vmatpush1.msra.mxu0 0.0
    %812 = vmatprep.subr.mxu0 0.0
    %813 = vmatpush1.msra.mxu0 0.0
    %814 = vmatprep.subr.mxu0 0.0
    %815 = vmatpush1.msra.mxu0 0.0
    %816 = vmatprep.mubr.f32.mxu0 0.0
    %817 = vmatmul.mubr.f32.gmra.mrb[0].mxu0 %v640
    %v818 = vpop.f32.mrb[0].mxu0
    %v819 = vadd.f32 %v675, %v818
    %v820 = vpop.f32.mrb[0].mxu0
    %v821 = vadd.f32 %v675, %v820
    %822 = vmatprep.mubr.f32.mxu0 0.0
    %823 = vmatmul.mubr.f32.gmra.mrb[0].mxu0 %v641
    %v824 = vpop.f32.mrb[0].mxu0
    %v825 = vadd.f32 %v680, %v824
    %v826 = vpop.f32.mrb[0].mxu0
    %v827 = vadd.f32 %v680, %v826
    %828 = vmatprep.mubr.f32.mxu0 0.0
    %829 = vmatmul.mubr.f32.gmra.mrb[0].mxu0 %v642
    %v830 = vpop.f32.mrb[0].mxu0
    %v831 = vadd.f32 %v685, %v830
    %v832 = vpop.f32.mrb[0].mxu0
    %v833 = vadd.f32 %v685, %v832
    %834 = vmatprep.mubr.f32.mxu0 0.0
    %835 = vmatmul.mubr.f32.gmra.mrb[0].mxu0 %v643
    %v836 = vpop.f32.mrb[0].mxu0
    %v837 = vadd.f32 %v690, %v836
    %v838 = vpop.f32.mrb[0].mxu0
    %v839 = vadd.f32 %v690, %v838
    %840 = vmatprep.mubr.f32.mxu0 0.0
    %841 = vmatmul.mubr.f32.gmra.mrb[0].mxu0 %v644
    %v842 = vpop.f32.mrb[0].mxu0
    %v843 = vadd.f32 %v695, %v842
    %v844 = vpop.f32.mrb[0].mxu0
    %v845 = vadd.f32 %v695, %v844
    %846 = vmatprep.mubr.f32.mxu0 0.0
    %847 = vmatmul.mubr.f32.gmra.mrb[0].mxu0 %v645
    %v848 = vpop.f32.mrb[0].mxu0
    %v849 = vadd.f32 %v700, %v848
    %v850 = vpop.f32.mrb[0].mxu0
    %v851 = vadd.f32 %v700, %v850
    %852 = vmatprep.mubr.f32.mxu0 0.0
    %853 = vmatmul.mubr.f32.gmra.mrb[0].mxu0 %v646
    %v854 = vpop.f32.mrb[0].mxu0
    %v855 = vadd.f32 %v705, %v854
    %v856 = vpop.f32.mrb[0].mxu0
    %v857 = vadd.f32 %v705, %v856
    %858 = vmatprep.mubr.f32.mxu0 0.0
    %859 = vmatmul.mubr.f32.gmra.mrb[0].mxu0 %v647
    %v860 = vpop.f32.mrb[0].mxu0
    %v861 = vadd.f32 %v710, %v860
    %v862 = vpop.f32.mrb[0].mxu0
    %v863 = vadd.f32 %v710, %v862
    %864 = vmatprep.mubr.f32.mxu0 0.0
    %865 = vmatmul.mubr.f32.gmra.mrb[0].mxu0 %v648
    %v866 = vpop.f32.mrb[0].mxu0
    %v867 = vadd.f32 %v715, %v866
    %v868 = vpop.f32.mrb[0].mxu0
    %v869 = vadd.f32 %v715, %v868
    %870 = vmatprep.mubr.f32.mxu0 0.0
    %871 = vmatmul.mubr.f32.gmra.mrb[0].mxu0 %v649
    %v872 = vpop.f32.mrb[0].mxu0
    %v873 = vadd.f32 %v720, %v872
    %v874 = vpop.f32.mrb[0].mxu0
    %v875 = vadd.f32 %v720, %v874
    %876 = vmatprep.mubr.f32.mxu0 0.0
    %877 = vmatmul.mubr.f32.gmra.mrb[0].mxu0 %v650
    %v878 = vpop.f32.mrb[0].mxu0
    %v879 = vadd.f32 %v725, %v878
    %v880 = vpop.f32.mrb[0].mxu0
    %v881 = vadd.f32 %v725, %v880
    %882 = vmatprep.mubr.f32.mxu0 0.0
    %883 = vmatmul.mubr.f32.gmra.mrb[0].mxu0 %v651
    %v884 = vpop.f32.mrb[0].mxu0
    %v885 = vadd.f32 %v730, %v884
    %v886 = vpop.f32.mrb[0].mxu0
    %v887 = vadd.f32 %v730, %v886
    %888 = vmatprep.mubr.f32.mxu0 0.0
    %889 = vmatmul.mubr.f32.gmra.mrb[0].mxu0 %v652
    %v890 = vpop.f32.mrb[0].mxu0
    %v891 = vadd.f32 %v735, %v890
    %v892 = vpop.f32.mrb[0].mxu0
    %v893 = vadd.f32 %v735, %v892
    %894 = vmatprep.mubr.f32.mxu0 0.0
    %895 = vmatmul.mubr.f32.gmra.mrb[0].mxu0 %v653
    %v896 = vpop.f32.mrb[0].mxu0
    %v897 = vadd.f32 %v740, %v896
    %v898 = vpop.f32.mrb[0].mxu0
    %v899 = vadd.f32 %v740, %v898
    %900 = vmatprep.mubr.f32.mxu0 0.0
    %901 = vmatmul.mubr.f32.gmra.mrb[0].mxu0 %v654
    %v902 = vpop.f32.mrb[0].mxu0
    %v903 = vadd.f32 %v745, %v902
    %v904 = vpop.f32.mrb[0].mxu0
    %v905 = vadd.f32 %v745, %v904
    %906 = vmatprep.mubr.f32.mxu0 0.0
    %907 = vmatmul.mubr.f32.gmra.mrb[0].mxu0 %v655
    %v908 = vpop.f32.mrb[0].mxu0
    %v909 = vadd.f32 %v750, %v908
    %v910 = vpop.f32.mrb[0].mxu0
    %v911 = vadd.f32 %v750, %v910
    %912 = vdwg.mxu0
    %v913 = vmax.f32 %v819, 0.0
    %v914 = vmax.f32 %v821, 0.0
    %v915 = vmax.f32 %v825, 0.0
    %v916 = vmax.f32 %v827, 0.0
    %v917 = vmax.f32 %v831, 0.0
    %v918 = vmax.f32 %v833, 0.0
    %v919 = vmax.f32 %v837, 0.0
    %v920 = vmax.f32 %v839, 0.0
    %v921 = vmax.f32 %v843, 0.0
    %v922 = vmax.f32 %v845, 0.0
    %v923 = vmax.f32 %v849, 0.0
    %v924 = vmax.f32 %v851, 0.0
    %v925 = vmax.f32 %v855, 0.0
    %v926 = vmax.f32 %v857, 0.0
    %v927 = vmax.f32 %v861, 0.0
    %v928 = vmax.f32 %v863, 0.0
    %v929 = vmax.f32 %v867, 0.0
    %v930 = vmax.f32 %v869, 0.0
    %v931 = vmax.f32 %v873, 0.0
    %v932 = vmax.f32 %v875, 0.0
    %v933 = vmax.f32 %v879, 0.0
    %v934 = vmax.f32 %v881, 0.0
    %v935 = vmax.f32 %v885, 0.0
    %v936 = vmax.f32 %v887, 0.0
    %v937 = vmax.f32 %v891, 0.0
    %v938 = vmax.f32 %v893, 0.0
    %v939 = vmax.f32 %v897, 0.0
    %v940 = vmax.f32 %v899, 0.0
    %v941 = vmax.f32 %v903, 0.0
    %v942 = vmax.f32 %v905, 0.0
    %v943 = vmax.f32 %v909, 0.0
    %v944 = vmax.f32 %v911, 0.0
    %v945 = vld [vmem:[%s7] sm:$0xff]
    %v946 = vld [vmem:[%s7 + $0x8] sm:$0xff]
    %v947 = vld [vmem:[%s7 + $0x10] sm:$0xff]
    %v948 = vld [vmem:[%s7 + $0x18] sm:$0xff]
    %v949 = vld [vmem:[%s7 + $0x20] sm:$0xff]
    %v950 = vld [vmem:[%s7 + $0x28] sm:$0xff]
    %v951 = vld [vmem:[%s7 + $0x30] sm:$0xff]
    %v952 = vld [vmem:[%s7 + $0x38] sm:$0xff]
    %v953 = vld [vmem:[%s7 + $0x40] sm:$0xff]
    %v954 = vld [vmem:[%s7 + $0x48] sm:$0xff]
    %v955 = vld [vmem:[%s7 + $0x50] sm:$0xff]
    %v956 = vld [vmem:[%s7 + $0x58] sm:$0xff]
    %v957 = vld [vmem:[%s7 + $0x60] sm:$0xff]
    %v958 = vld [vmem:[%s7 + $0x68] sm:$0xff]
    %v959 = vld [vmem:[%s7 + $0x70] sm:$0xff]
    %v960 = vld [vmem:[%s7 + $0x78] sm:$0xff]
    %962 = vset.pattern.permute.xlu0 0
    %963 = vperm.xlu0 %962, %v945
    %v964 = vpop.permute.xlu0 %963
    %967 = vset.pattern.permute.xlu0 0
    %968 = vperm.xlu0 %967, %v946
    %v969 = vpop.permute.xlu0 %968
    %972 = vset.pattern.permute.xlu0 0
    %973 = vperm.xlu0 %972, %v947
    %v974 = vpop.permute.xlu0 %973
    %977 = vset.pattern.permute.xlu0 0
    %978 = vperm.xlu0 %977, %v948
    %v979 = vpop.permute.xlu0 %978
    %982 = vset.pattern.permute.xlu0 0
    %983 = vperm.xlu0 %982, %v949
    %v984 = vpop.permute.xlu0 %983
    %987 = vset.pattern.permute.xlu0 0
    %988 = vperm.xlu0 %987, %v950
    %v989 = vpop.permute.xlu0 %988
    %992 = vset.pattern.permute.xlu0 0
    %993 = vperm.xlu0 %992, %v951
    %v994 = vpop.permute.xlu0 %993
    %997 = vset.pattern.permute.xlu0 0
    %998 = vperm.xlu0 %997, %v952
    %v999 = vpop.permute.xlu0 %998
    %1002 = vset.pattern.permute.xlu0 0
    %1003 = vperm.xlu0 %1002, %v953
    %v1004 = vpop.permute.xlu0 %1003
    %1007 = vset.pattern.permute.xlu0 0
    %1008 = vperm.xlu0 %1007, %v954
    %v1009 = vpop.permute.xlu0 %1008
    %1012 = vset.pattern.permute.xlu0 0
    %1013 = vperm.xlu0 %1012, %v955
    %v1014 = vpop.permute.xlu0 %1013
    %1017 = vset.pattern.permute.xlu0 0
    %1018 = vperm.xlu0 %1017, %v956
    %v1019 = vpop.permute.xlu0 %1018
    %1022 = vset.pattern.permute.xlu0 0
    %1023 = vperm.xlu0 %1022, %v957
    %v1024 = vpop.permute.xlu0 %1023
    %1027 = vset.pattern.permute.xlu0 0
    %1028 = vperm.xlu0 %1027, %v958
    %v1029 = vpop.permute.xlu0 %1028
    %1032 = vset.pattern.permute.xlu0 0
    %1033 = vperm.xlu0 %1032, %v959
    %v1034 = vpop.permute.xlu0 %1033
    %1037 = vset.pattern.permute.xlu0 0
    %1038 = vperm.xlu0 %1037, %v960
    %v1039 = vpop.permute.xlu0 %1038
    %v1041 = vmul.f32 %v964, %v913
    %v1042 = vmul.f32 %v964, %v914
    %v1043 = vmul.f32 %v969, %v915
    %v1044 = vmul.f32 %v969, %v916
    %v1045 = vmul.f32 %v974, %v917
    %v1046 = vmul.f32 %v974, %v918
    %v1047 = vmul.f32 %v979, %v919
    %v1048 = vmul.f32 %v979, %v920
    %v1049 = vmul.f32 %v984, %v921
    %v1050 = vmul.f32 %v984, %v922
    %v1051 = vmul.f32 %v989, %v923
    %v1052 = vmul.f32 %v989, %v924
    %v1053 = vmul.f32 %v994, %v925
    %v1054 = vmul.f32 %v994, %v926
    %v1055 = vmul.f32 %v999, %v927
    %v1056 = vmul.f32 %v999, %v928
    %v1057 = vmul.f32 %v1004, %v929
    %v1058 = vmul.f32 %v1004, %v930
    %v1059 = vmul.f32 %v1009, %v931
    %v1060 = vmul.f32 %v1009, %v932
    %v1061 = vmul.f32 %v1014, %v933
    %v1062 = vmul.f32 %v1014, %v934
    %v1063 = vmul.f32 %v1019, %v935
    %v1064 = vmul.f32 %v1019, %v936
    %v1065 = vmul.f32 %v1024, %v937
    %v1066 = vmul.f32 %v1024, %v938
    %v1067 = vmul.f32 %v1029, %v939
    %v1068 = vmul.f32 %v1029, %v940
    %v1069 = vmul.f32 %v1034, %v941
    %v1070 = vmul.f32 %v1034, %v942
    %v1071 = vmul.f32 %v1039, %v943
    %v1072 = vmul.f32 %v1039, %v944
    %v1073 = vadd.f32 %v1041, %v1043
    %v1074 = vadd.f32 %v1073, %v1045
    %v1075 = vadd.f32 %v1074, %v1047
    %v1076 = vadd.f32 %v1075, %v1049
    %v1077 = vadd.f32 %v1076, %v1051
    %v1078 = vadd.f32 %v1077, %v1053
    %v1079 = vadd.f32 %v1078, %v1055
    %v1080 = vadd.f32 %v1079, %v1057
    %v1081 = vadd.f32 %v1080, %v1059
    %v1082 = vadd.f32 %v1081, %v1061
    %v1083 = vadd.f32 %v1082, %v1063
    %v1084 = vadd.f32 %v1083, %v1065
    %v1085 = vadd.f32 %v1084, %v1067
    %v1086 = vadd.f32 %v1085, %v1069
    %v1087 = vadd.f32 %v1086, %v1071
    %v1088 = vrot.slane %v1087, 4
    %v1089 = vadd.f32 %v1087, %v1088
    %v1090 = vrot.slane %v1089, 2
    %v1091 = vadd.f32 %v1089, %v1090
    %v1092 = vrot.slane %v1091, 1
    %v1093 = vadd.f32 %v1091, %v1092
    %v1094 = vadd.f32 %v1042, %v1044
    %v1095 = vadd.f32 %v1094, %v1046
    %v1096 = vadd.f32 %v1095, %v1048
    %v1097 = vadd.f32 %v1096, %v1050
    %v1098 = vadd.f32 %v1097, %v1052
    %v1099 = vadd.f32 %v1098, %v1054
    %v1100 = vadd.f32 %v1099, %v1056
    %v1101 = vadd.f32 %v1100, %v1058
    %v1102 = vadd.f32 %v1101, %v1060
    %v1103 = vadd.f32 %v1102, %v1062
    %v1104 = vadd.f32 %v1103, %v1064
    %v1105 = vadd.f32 %v1104, %v1066
    %v1106 = vadd.f32 %v1105, %v1068
    %v1107 = vadd.f32 %v1106, %v1070
    %v1108 = vadd.f32 %v1107, %v1072
    %v1109 = vrot.slane %v1108, 4
    %v1110 = vadd.f32 %v1108, %v1109
    %v1111 = vrot.slane %v1110, 2
    %v1112 = vadd.f32 %v1110, %v1111
    %v1113 = vrot.slane %v1112, 1
    %v1114 = vadd.f32 %v1112, %v1113
    %v1115 = vld [vmem:[#allocation2] sm:$0x1]
    %1117 = vset.pattern.permute.xlu0 0
    %1118 = vperm.xlu0 %1117, %v1115
    %v1119 = vpop.permute.xlu0 %1118
    %v1121 = vlaneseq
    %v1122 = vshrl.u32 %v1121, 7
    %v1123 = vsub.s32 0, %v1122
    %v1124 = vrot.slane %v1119, %v1123
    %v1125 = vadd.f32 %v1093, %v1124
    %v1126 = vadd.f32 %v1114, %v1124
    %v1129 = vcombine.low %v1125, %v1126
    %v1131 = vunpack.c.l.s4 1966171168
    %v1132 = vunpack.c.0.s8 %v1131
    %v1133 = vlaneseq
    %v1134 = vshrl.u32 %v1133, 7
    %v1135 = vsub.s32 %v1132, %v1134
    %v1136 = vrot.slane %v1129, %v1135
    %v1138 = vunpack.c.l.s4 1966171168
    %v1139 = vunpack.c.0.s8 %v1138
    %v1140 = vlaneseq
    %v1141 = vshrl.u32 %v1140, 7
    %v1142 = vsub.s32 %v1139, %v1141
    %v1143 = vrot.slane %v1136, %v1142
    %v1145 = vlaneseq
    %vm1146 = vcmp.ge.s32.totalorder %v1145, 0
    %vm1147 = vcmp.lt.s32.totalorder %v1145, 256
    %vm1148 = vmand %vm1146, %vm1147
    %1149 = vst.msk [vmem:[#allocation3] sm:$0x3] %vm1148, %v1143
    // Predicated region
    $region38: #{tpu_custom_call.1} parent=1 // pred_check
      _
    $region39: #{tpu_custom_call.1} parent=1 // pred_check_branch
      %1151 = sbr.rel (0) target = $region41
    $region40: #{tpu_custom_call.1} parent=1 // pred_region
      %s1153 = ssub.s32 32, 32
      %1154 = vsyncadd [#allocation4], %s1153
      %s1156 = sshll.u32 [#allocation3], 4
      %s1157 = int_to_ptr.vmem [resolvable:$true] %s1156
      %1159 = dma.vmem_to_hbm [thread:$0]  %s1157, 32, %s9, [#allocation4]
    $region41: #{tpu_custom_call.1} parent=1 // pred_fallthru
      _
    // Predicated region
    $region42: #{tpu_custom_call.1} parent=1 // pred_check
      _
    $region43: #{tpu_custom_call.1} parent=1 // pred_check_branch
      %1161 = sbr.rel (0) target = $region45
    $region44: #{tpu_custom_call.1} parent=1 // pred_region
      %1162 = dma.done [#allocation4], 32
    $region45: #{tpu_custom_call.1} parent=1 // pred_fallthru
      _
    %1163 = vsyncpa [#allocation4], 1

</llo_original>
